<compile_context>
chip_gen: v7x
topology: tpu7x:2x2x1
jax: 0.10.0
libtpu: 0.0.40
codegen_flags: <defaults>
</compile_context>

<pallas_src>
import functools

import jax
import jax.numpy as jnp
from jax.experimental import pallas as pl
from jax.experimental.pallas import tpu as pltpu


def _compute_taps(scale, padding, output_padding):
    """Static (kernel-tap k, input-shift d) pairs per output phase r.

    out[t] with t = m*scale + r receives y[m + d] @ W2[:, :, k] whenever
    (r + padding - k) % scale == 0, with d = (r + padding - k) // scale and 0 <= m+d < L.
    """
    K = scale + 2 * padding - output_padding
    taps = []
    for r in range(scale):
        lst = []
        for k in range(K):
            num = r + padding - k
            if num % scale == 0:
                lst.append((k, num // scale))
        taps.append(tuple(lst))
    return tuple(taps), K


def _phase_segments(taps_r, L):
    """Split rows [0, L) into segments where the set of in-range taps is constant.

    Avoids both zero-padded shifted copies and scatter-adds: each segment is a plain
    slice-add of z columns.
    """
    cuts = {0, L}
    for (_, d) in taps_r:
        if d > 0:
            cuts.add(min(max(L - d, 0), L))
        elif d < 0:
            cuts.add(min(max(-d, 0), L))
    cuts = sorted(cuts)
    segs = []
    for a, b in zip(cuts[:-1], cuts[1:]):
        valid = tuple((k, d) for (k, d) in taps_r if a + d >= 0 and b + d <= L)
        segs.append((a, b, valid))
    return tuple(segs)


def _upsample_kernel(x_ref, wc_ref, bz_ref, b2_ref, out_ref, *, segs, Bt, L, D, K, scale):
    # x_ref:  (Bt, L, D)
    # wc_ref: (D, K*D)   fused weights: wc[:, k*D:(k+1)*D] = W1^T @ W2[:, :, k]
    # bz_ref: (1, K*D)   bz[k*D:(k+1)*D]  = b1 @ W2[:, :, k]
    # b2_ref: (1, D)     ConvTranspose1d bias
    # out_ref:(Bt, L, scale*D)  columns [r*D:(r+1)*D] hold output phase r (= time m*scale + r)

    # Single large MXU matmul: M = Bt*L rows, N = K*D columns.
    x2 = x_ref[...].reshape(Bt * L, D)
    z = jnp.dot(x2, wc_ref[...], preferred_element_type=jnp.float32) + bz_ref[...]
    z = z.reshape(Bt, L, K * D)  # z[:, m, k*D:(k+1)*D] == y[:, m] @ W2[:, :, k]

    # Hoisted bias broadcast (same for every phase).
    b2_full = jnp.zeros((Bt, L, D), jnp.float32) + b2_ref[...]

    phase_outs = []
    for r in range(scale):
        pieces = []
        for (a, b, valid) in segs[r]:
            piece = b2_full[:, a:b, :]
            for (k, d) in valid:
                piece = piece + z[:, a + d:b + d, k * D:(k + 1) * D]
            pieces.append(piece)
        phase = pieces[0] if len(pieces) == 1 else jnp.concatenate(pieces, axis=1)
        phase_outs.append(phase)

    # Lane-dense full-block store: (Bt, L, scale*D), every phase at a 128-aligned lane offset.
    out = phase_outs[0] if scale == 1 else jnp.concatenate(phase_outs, axis=-1)
    out_ref[...] = out.astype(out_ref.dtype)


def _pick_batch_block(B, L, target_rows=512):
    """Largest divisor of B such that Bt*L <= target_rows (to feed the MXU M dimension)."""
    bt = 1
    for cand in range(1, B + 1):
        if B % cand == 0 and cand * L <= max(target_rows, L):
            bt = cand
    return bt


def upsample_layer(x, w1, b1, w2, b2, *, scale, padding=1, output_padding=1):
    """Pallas implementation of UpSampleLayer.forward.

    x: (B, L, D)            -- same as the PyTorch module input
    w1: (D, D, 1), b1: (D,) -- nn.Conv1d(d_model, d_model, kernel_size=1) params
    w2: (D, D, K), b2: (D,) -- nn.ConvTranspose1d params, K = scale + 2*padding - output_padding
    returns: (B, scale * L, D)
    """
    B, L, D = x.shape
    taps, K = _compute_taps(scale, padding, output_padding)
    assert w2.shape == (D, D, K)
    segs = tuple(_phase_segments(taps[r], L) for r in range(scale))

    # Host-side weight fusion (free): fold the 1x1 conv into the transposed conv.
    w1t = jnp.transpose(w1[:, :, 0])               # (D_in, D_out): y = x @ w1t + b1
    w2t = jnp.transpose(w2, (2, 0, 1))             # (K, D_in, D_out): z_k = y @ w2t[k]
    wc = jnp.einsum("di,kio->dko", w1t, w2t).reshape(D, K * D)   # fused (D, K*D)
    bz = jnp.einsum("i,kio->ko", b1, w2t).reshape(1, K * D)      # fused bias (1, K*D)
    b2r = b2.reshape(1, D)

    Bt = _pick_batch_block(B, L)
    grid = (B // Bt,)
    # TODO(synk): for very large L*D (v7x's 64 MiB VMEM) add an L-tile grid axis with a 1-row
    # halo and set pltpu.CompilerParams(vmem_limit_bytes=...); also split Bt when B allows to
    # expose >=2 parallel grid slices for v7x's two TensorCores.

    kernel = functools.partial(
        _upsample_kernel, segs=segs, Bt=Bt, L=L, D=D, K=K, scale=scale)

    itemsize = x.dtype.itemsize
    cost = pl.CostEstimate(
        flops=2 * B * L * D * K * D,
        transcendentals=0,
        bytes_accessed=(B * L * D + B * L * scale * D) * itemsize
        + (D * K * D + K * D + D) * 4,
    )

    out = pl.pallas_call(
        kernel,
        out_shape=jax.ShapeDtypeStruct((B, L, scale * D), x.dtype),
        grid_spec=pltpu.PrefetchScalarGridSpec(
            num_scalar_prefetch=0,
            grid=grid,
            in_specs=[
                pl.BlockSpec((Bt, L, D), lambda i: (i, 0, 0)),
                pl.BlockSpec((D, K * D), lambda i: (0, 0)),     # weights stay VMEM-resident
                pl.BlockSpec((1, K * D), lambda i: (0, 0)),
                pl.BlockSpec((1, D), lambda i: (0, 0)),
            ],
            out_specs=pl.BlockSpec((Bt, L, scale * D), lambda i: (i, 0, 0)),
        ),
        compiler_params=pltpu.CompilerParams(dimension_semantics=("parallel",)),
        cost_estimate=cost,
    )(x, wc, bz, b2r)

    # (B, L, scale*D) and (B, L*scale, D) have identical flat layout -> free reshape.
    return out.reshape(B, L * scale, D)


def upsample_layer_ref(x, w1, b1, w2, b2, *, scale, padding=1, output_padding=1):
    """Pure-JAX reference with the exact PyTorch Conv1d/ConvTranspose1d semantics."""
    B, L, D = x.shape
    K = scale + 2 * padding - output_padding
    y = jnp.einsum("bld,od->blo", x, w1[:, :, 0]) + b1            # proj (B, L, D)
    L_out = L * scale
    out = jnp.zeros((B, L_out, D), jnp.float32) + b2
    for t in range(L_out):
        for k in range(K):
            num = t + padding - k
            if num % scale == 0:
                l = num // scale
                if 0 <= l < L:
                    out = out.at[:, t, :].add(
                        jnp.einsum("bd,de->be", y[:, l, :], w2[:, :, k]))
    return out.astype(x.dtype)


if __name__ == "__main__":
    # Small shapes consistent with the module's forward: x is (B, L, D).
    B, L, D = 2, 8, 128
    scale, padding, output_padding = 2, 1, 1
    K = scale + 2 * padding - output_padding  # = 3

    key = jax.random.PRNGKey(0)
    kx, k1, k2, k3, k4 = jax.random.split(key, 5)
    x = jax.random.normal(kx, (B, L, D), jnp.float32)
    # Deterministic parameter init (shapes match nn.Conv1d / nn.ConvTranspose1d).
    w1 = jax.random.normal(k1, (D, D, 1), jnp.float32) * 0.05   # Conv1d weight (out, in, 1)
    b1 = jax.random.normal(k2, (D,), jnp.float32) * 0.05
    w2 = jax.random.normal(k3, (D, D, K), jnp.float32) * 0.05   # ConvTranspose1d weight (in, out, K)
    b2 = jax.random.normal(k4, (D,), jnp.float32) * 0.05

    out = upsample_layer(x, w1, b1, w2, b2,
                         scale=scale, padding=padding, output_padding=output_padding)
    out = jax.block_until_ready(out)

    ref = upsample_layer_ref(x, w1, b1, w2, b2,
                             scale=scale, padding=padding, output_padding=output_padding)
    assert out.shape == (B, scale * L, D)
    assert jnp.allclose(out, ref, atol=1e-4, rtol=1e-4)
    print("KERNEL_OK")
</pallas_src>

<mosaic_0001>
module attributes {stable_mosaic.version = 11 : i64} {
  func.func @_upsample_kernel(%arg0: i32, %arg1: memref<2x8x128xf32, #tpu.memory_space<vmem>>, %arg2: memref<128x384xf32, #tpu.memory_space<vmem>>, %arg3: memref<1x384xf32, #tpu.memory_space<vmem>>, %arg4: memref<1x128xf32, #tpu.memory_space<vmem>>, %arg5: memref<2x8x256xf32, #tpu.memory_space<vmem>>) attributes {dimension_semantics = [#tpu.dimension_semantics<parallel>], iteration_bounds = array<i64: 1>, scalar_prefetch = 0 : i64, scratch_operands = 0 : i64, tpu.core_type = #tpu.core_type<tc>, window_params = [{transform_indices = @transform_0, window_bounds = array<i64: 2, 8, 128>}, {pipeline_mode = #tpu.pipeline_mode<synchronous>, transform_indices = @transform_1, window_bounds = array<i64: 128, 384>}, {pipeline_mode = #tpu.pipeline_mode<synchronous>, transform_indices = @transform_2, window_bounds = array<i64: 1, 384>}, {pipeline_mode = #tpu.pipeline_mode<synchronous>, transform_indices = @transform_3, window_bounds = array<i64: 1, 128>}, {transform_indices = @transform_4, window_bounds = array<i64: 2, 8, 256>}]} {
    %c0 = arith.constant 0 : index
    %c0_0 = arith.constant 0 : index
    %c0_1 = arith.constant 0 : index
    %0 = vector.load %arg1[%c0, %c0_0, %c0_1] : memref<2x8x128xf32, #tpu.memory_space<vmem>>, vector<2x8x128xf32>
    %1 = vector.shape_cast %0 : vector<2x8x128xf32> to vector<16x128xf32>
    %c0_2 = arith.constant 0 : index
    %c0_3 = arith.constant 0 : index
    %2 = vector.load %arg2[%c0_2, %c0_3] : memref<128x384xf32, #tpu.memory_space<vmem>>, vector<128x384xf32>
    %cst = arith.constant dense<0.000000e+00> : vector<16x384xf32>
    %3 = tpu.matmul %1, %2, %cst {dimension_numbers = #tpu.dot_dimension_numbers<[1], [0], [0], [1], [0, 0, 1, 1], [], []>} : vector<16x128xf32>, vector<128x384xf32>, vector<16x384xf32> -> vector<16x384xf32>
    %c0_4 = arith.constant 0 : index
    %c0_5 = arith.constant 0 : index
    %4 = vector.load %arg3[%c0_4, %c0_5] : memref<1x384xf32, #tpu.memory_space<vmem>>, vector<1x384xf32>
    %5 = vector.broadcast %4 : vector<1x384xf32> to vector<16x384xf32>
    %6 = arith.addf %3, %5 : vector<16x384xf32>
    %7 = vector.shape_cast %6 : vector<16x384xf32> to vector<2x8x384xf32>
    %cst_6 = arith.constant 0.000000e+00 : f32
    %8 = vector.broadcast %cst_6 : f32 to vector<2x8x128xf32>
    %c0_7 = arith.constant 0 : index
    %c0_8 = arith.constant 0 : index
    %9 = vector.load %arg4[%c0_7, %c0_8] : memref<1x128xf32, #tpu.memory_space<vmem>>, vector<1x128xf32>
    %10 = vector.shape_cast %9 : vector<1x128xf32> to vector<1x1x128xf32>
    %11 = vector.broadcast %10 : vector<1x1x128xf32> to vector<2x8x128xf32>
    %12 = arith.addf %8, %11 : vector<2x8x128xf32>
    %13 = vector.extract_strided_slice %7 {offsets = [0, 0, 128], sizes = [2, 8, 128], strides = [1, 1, 1]} : vector<2x8x384xf32> to vector<2x8x128xf32>
    %14 = arith.addf %12, %13 : vector<2x8x128xf32>
    %15 = vector.extract_strided_slice %12 {offsets = [0, 0, 0], sizes = [2, 7, 128], strides = [1, 1, 1]} : vector<2x8x128xf32> to vector<2x7x128xf32>
    %16 = vector.extract_strided_slice %7 {offsets = [0, 1, 0], sizes = [2, 7, 128], strides = [1, 1, 1]} : vector<2x8x384xf32> to vector<2x7x128xf32>
    %17 = arith.addf %15, %16 : vector<2x7x128xf32>
    %18 = vector.extract_strided_slice %7 {offsets = [0, 0, 256], sizes = [2, 7, 128], strides = [1, 1, 1]} : vector<2x8x384xf32> to vector<2x7x128xf32>
    %19 = arith.addf %17, %18 : vector<2x7x128xf32>
    %20 = vector.extract_strided_slice %12 {offsets = [0, 7, 0], sizes = [2, 1, 128], strides = [1, 1, 1]} : vector<2x8x128xf32> to vector<2x1x128xf32>
    %21 = vector.extract_strided_slice %7 {offsets = [0, 7, 256], sizes = [2, 1, 128], strides = [1, 1, 1]} : vector<2x8x384xf32> to vector<2x1x128xf32>
    %22 = arith.addf %20, %21 : vector<2x1x128xf32>
    %23 = tpu.concatenate %19, %22 in 1 : vector<2x7x128xf32>, vector<2x1x128xf32> -> vector<2x8x128xf32>
    %24 = tpu.concatenate %14, %23 in 2 : vector<2x8x128xf32>, vector<2x8x128xf32> -> vector<2x8x256xf32>
    %c0_9 = arith.constant 0 : index
    %c0_10 = arith.constant 0 : index
    %c0_11 = arith.constant 0 : index
    %25 = vector.load %arg5[%c0_9, %c0_10, %c0_11] : memref<2x8x256xf32, #tpu.memory_space<vmem>>, vector<2x8x256xf32>
    tpu.vector_store %arg5[%c0_9, %c0_10, %c0_11], %24 {strides = array<i32>} : memref<2x8x256xf32, #tpu.memory_space<vmem>>, vector<2x8x256xf32>,
    return
  }
  func.func @transform_0(%arg0: i32) -> (i32, i32, i32) {
    %c0_i32 = arith.constant 0 : i32
    %c0_i32_0 = arith.constant 0 : i32
    %c0_i32_1 = arith.constant 0 : i32
    return %arg0, %c0_i32, %c0_i32_0 : i32, i32, i32
  }
  func.func @transform_1(%arg0: i32) -> (i32, i32) {
    %c0_i32 = arith.constant 0 : i32
    %c0_i32_0 = arith.constant 0 : i32
    %c0_i32_1 = arith.constant 0 : i32
    return %c0_i32, %c0_i32_0 : i32, i32
  }
  func.func @transform_2(%arg0: i32) -> (i32, i32) {
    %c0_i32 = arith.constant 0 : i32
    %c0_i32_0 = arith.constant 0 : i32
    %c0_i32_1 = arith.constant 0 : i32
    return %c0_i32, %c0_i32_0 : i32, i32
  }
  func.func @transform_3(%arg0: i32) -> (i32, i32) {
    %c0_i32 = arith.constant 0 : i32
    %c0_i32_0 = arith.constant 0 : i32
    %c0_i32_1 = arith.constant 0 : i32
    return %c0_i32, %c0_i32_0 : i32, i32
  }
  func.func @transform_4(%arg0: i32) -> (i32, i32, i32) {
    %c0_i32 = arith.constant 0 : i32
    %c0_i32_0 = arith.constant 0 : i32
    %c0_i32_1 = arith.constant 0 : i32
    return %arg0, %c0_i32, %c0_i32_0 : i32, i32, i32
  }
}

</mosaic_0001>

<llo_original>
// kernel: tpu_custom_call.1
$region0: #{tpu_custom_call.1}
  #allocation0 [shape = 'u32[]', space=smem, size = 0x4, offset = 0x4, fixed_abs, tag = 'smem constant byte address 0x4 - core index']
  #allocation1 [shape = 'u32[144,128]{1,0:T(1,128)}', space=vmem, size = 0x12000, scoped, tag = 'internal scratch']
  %s0 = inlined_call_operand.hbm [shape: f32[2,8,128], index: 0, kind: input, shape index: {}]
  %s1 = inlined_call_operand.hbm [shape: f32[128,384], index: 1, kind: input, shape index: {}]
  %s2 = inlined_call_operand.vmem [shape: f32[1,384], index: 2, kind: input, shape index: {}]
  %s3 = inlined_call_operand.vmem [shape: f32[1,128], index: 3, kind: input, shape index: {}]
  %s4 = inlined_call_operand.hbm [shape: f32[2,8,256], index: 4, kind: output, shape index: {}]
  %s5 = sld [smem:[#allocation0]]
  $region34: #{tpu_custom_call.1} parent=0
    _
  %s7 = ssub.s32 1, %s5
  %s8 = scalar_select 0, %s7, %s5
  $region1: #{tpu_custom_call.1} parent=0
    #allocation2 [shape = 'u8[8192]{0}', space=vmem, size = 0x2000, scoped, tag = 'input window, operand 0, single buffered']
    #allocation3 [shape = 's32[1]{0}', space=sflag, size = 0x4, scoped, tag = 'scoped memory for tpu_custom_call.1']
    #allocation4 [shape = 's32[1]{0}', space=sflag, size = 0x4, scoped, tag = 'scoped memory for tpu_custom_call.1']
    #allocation5 [shape = 'u8[196608]{0}', space=vmem, size = 0x30000, scoped, tag = 'input window, operand 1, single buffered']
    #allocation6 [shape = 's32[1]{0}', space=sflag, size = 0x4, scoped, tag = 'scoped memory for tpu_custom_call.1']
    #allocation7 [shape = 'u8[16384]{0}', space=vmem, size = 0x4000, scoped, tag = 'output window, operand 0, single buffered']
    %9 = vsyncpa [#allocation3], 0
    %10 = vsyncpa [#allocation6], 0
    %11 = vsyncpa [#allocation4], 0
    // Predicated region
    $region2: #{tpu_custom_call.1} parent=1 // pred_check
      _
    $region3: #{tpu_custom_call.1} parent=1 // pred_check_branch
      %13 = sbr.rel (0) target = $region5
    $region4: #{tpu_custom_call.1} parent=1 // pred_region
      %s15 = ssub.s32 256, 256
      %16 = vsyncadd [#allocation3], %s15
      %s17 = sshll.u32 [#allocation2], 4
      %s18 = int_to_ptr.vmem [resolvable:$true] %s17
      %23 = dma.hbm_to_vmem [thread:$0]  %s0, 256, %s18, [#allocation3], 128, 128, 8
    $region5: #{tpu_custom_call.1} parent=1 // pred_fallthru
      _
    // Predicated region
    $region6: #{tpu_custom_call.1} parent=1 // pred_check
      _
    $region7: #{tpu_custom_call.1} parent=1 // pred_check_branch
      %25 = sbr.rel (0) target = $region9
    $region8: #{tpu_custom_call.1} parent=1 // pred_region
      %s27 = ssub.s32 6144, 6144
      %28 = vsyncadd [#allocation6], %s27
      %s29 = sshll.u32 [#allocation5], 4
      %s30 = int_to_ptr.vmem [resolvable:$true] %s29
      %35 = dma.hbm_to_vmem [thread:$0]  %s1, 6144, %s30, [#allocation6], 384, 384, 24
    $region9: #{tpu_custom_call.1} parent=1 // pred_fallthru
      _
    // Predicated region
    $region10: #{tpu_custom_call.1} parent=1 // pred_check
      _
    $region11: #{tpu_custom_call.1} parent=1 // pred_check_branch
      %37 = sbr.rel (0) target = $region13
    $region12: #{tpu_custom_call.1} parent=1 // pred_region
      _
    $region13: #{tpu_custom_call.1} parent=1 // pred_fallthru
      _
    // Predicated region
    $region14: #{tpu_custom_call.1} parent=1 // pred_check
      _
    $region15: #{tpu_custom_call.1} parent=1 // pred_check_branch
      %39 = sbr.rel (0) target = $region17
    $region16: #{tpu_custom_call.1} parent=1 // pred_region
      _
    $region17: #{tpu_custom_call.1} parent=1 // pred_fallthru
      _
    // Predicated region
    $region18: #{tpu_custom_call.1} parent=1 // pred_check
      _
    $region19: #{tpu_custom_call.1} parent=1 // pred_check_branch
      %41 = sbr.rel (0) target = $region21
    $region20: #{tpu_custom_call.1} parent=1 // pred_region
      %42 = dma.done [#allocation3], 256
    $region21: #{tpu_custom_call.1} parent=1 // pred_fallthru
      _
    // Predicated region
    $region22: #{tpu_custom_call.1} parent=1 // pred_check
      _
    $region23: #{tpu_custom_call.1} parent=1 // pred_check_branch
      %44 = sbr.rel (0) target = $region25
    $region24: #{tpu_custom_call.1} parent=1 // pred_region
      %45 = dma.done [#allocation6], 6144
    $region25: #{tpu_custom_call.1} parent=1 // pred_fallthru
      _
    %v46 = vld [vmem:[#allocation2] sm:$0xff]
    %v47 = vld [vmem:[#allocation2 + $0x8] sm:$0xff]
    %v48 = vld [vmem:[#allocation5] sm:$0xff]
    %v49 = vld [vmem:[#allocation5 + $0x8] sm:$0xff]
    %v50 = vld [vmem:[#allocation5 + $0x10] sm:$0xff]
    %v51 = vld [vmem:[#allocation5 + $0x18] sm:$0xff]
    %v52 = vld [vmem:[#allocation5 + $0x20] sm:$0xff]
    %v53 = vld [vmem:[#allocation5 + $0x28] sm:$0xff]
    %v54 = vld [vmem:[#allocation5 + $0x30] sm:$0xff]
    %v55 = vld [vmem:[#allocation5 + $0x38] sm:$0xff]
    %v56 = vld [vmem:[#allocation5 + $0x40] sm:$0xff]
    %v57 = vld [vmem:[#allocation5 + $0x48] sm:$0xff]
    %v58 = vld [vmem:[#allocation5 + $0x50] sm:$0xff]
    %v59 = vld [vmem:[#allocation5 + $0x58] sm:$0xff]
    %v60 = vld [vmem:[#allocation5 + $0x60] sm:$0xff]
    %v61 = vld [vmem:[#allocation5 + $0x68] sm:$0xff]
    %v62 = vld [vmem:[#allocation5 + $0x70] sm:$0xff]
    %v63 = vld [vmem:[#allocation5 + $0x78] sm:$0xff]
    %v64 = vld [vmem:[#allocation5 + $0x80] sm:$0xff]
    %v65 = vld [vmem:[#allocation5 + $0x88] sm:$0xff]
    %v66 = vld [vmem:[#allocation5 + $0x90] sm:$0xff]
    %v67 = vld [vmem:[#allocation5 + $0x98] sm:$0xff]
    %v68 = vld [vmem:[#allocation5 + $0xa0] sm:$0xff]
    %v69 = vld [vmem:[#allocation5 + $0xa8] sm:$0xff]
    %v70 = vld [vmem:[#allocation5 + $0xb0] sm:$0xff]
    %v71 = vld [vmem:[#allocation5 + $0xb8] sm:$0xff]
    %v72 = vld [vmem:[#allocation5 + $0xc0] sm:$0xff]
    %v73 = vld [vmem:[#allocation5 + $0xc8] sm:$0xff]
    %v74 = vld [vmem:[#allocation5 + $0xd0] sm:$0xff]
    %v75 = vld [vmem:[#allocation5 + $0xd8] sm:$0xff]
    %v76 = vld [vmem:[#allocation5 + $0xe0] sm:$0xff]
    %v77 = vld [vmem:[#allocation5 + $0xe8] sm:$0xff]
    %v78 = vld [vmem:[#allocation5 + $0xf0] sm:$0xff]
    %v79 = vld [vmem:[#allocation5 + $0xf8] sm:$0xff]
    %v80 = vld [vmem:[#allocation5 + $0x100] sm:$0xff]
    %v81 = vld [vmem:[#allocation5 + $0x108] sm:$0xff]
    %v82 = vld [vmem:[#allocation5 + $0x110] sm:$0xff]
    %v83 = vld [vmem:[#allocation5 + $0x118] sm:$0xff]
    %v84 = vld [vmem:[#allocation5 + $0x120] sm:$0xff]
    %v85 = vld [vmem:[#allocation5 + $0x128] sm:$0xff]
    %v86 = vld [vmem:[#allocation5 + $0x130] sm:$0xff]
    %v87 = vld [vmem:[#allocation5 + $0x138] sm:$0xff]
    %v88 = vld [vmem:[#allocation5 + $0x140] sm:$0xff]
    %v89 = vld [vmem:[#allocation5 + $0x148] sm:$0xff]
    %v90 = vld [vmem:[#allocation5 + $0x150] sm:$0xff]
    %v91 = vld [vmem:[#allocation5 + $0x158] sm:$0xff]
    %v92 = vld [vmem:[#allocation5 + $0x160] sm:$0xff]
    %v93 = vld [vmem:[#allocation5 + $0x168] sm:$0xff]
    %v94 = vld [vmem:[#allocation5 + $0x170] sm:$0xff]
    %v95 = vld [vmem:[#allocation5 + $0x178] sm:$0xff]
    %v96 = vld [vmem:[%s2] sm:$0x7]
    %v98 = vlaneseq
    %v99 = vshrl.u32 %v98, 7
    %v100 = vsub.s32 0, %v99
    %v101 = vrot.slane %v96, %v100
    %v102 = vlaneseq
    %v103 = vshrl.u32 %v102, 7
    %v104 = vsub.s32 1, %v103
    %v105 = vrot.slane %v96, %v104
    %v106 = vlaneseq
    %v107 = vshrl.u32 %v106, 7
    %v108 = vsub.s32 2, %v107
    %v109 = vrot.slane %v96, %v108
    %113 = vmatprep.subr.mxu0 %v49
    %114 = vmatpush1.msra.mxu0 %v48
    %115 = vmatprep.subr.mxu0 %v52
    %116 = vmatpush1.msra.mxu0 %v51
    %117 = vmatprep.subr.mxu0 %v55
    %118 = vmatpush1.msra.mxu0 %v54
    %119 = vmatprep.subr.mxu0 %v58
    %120 = vmatpush1.msra.mxu0 %v57
    %121 = vmatprep.subr.mxu0 %v61
    %122 = vmatpush1.msra.mxu0 %v60
    %123 = vmatprep.subr.mxu0 %v64
    %124 = vmatpush1.msra.mxu0 %v63
    %125 = vmatprep.subr.mxu0 %v67
    %126 = vmatpush1.msra.mxu0 %v66
    %127 = vmatprep.subr.mxu0 %v70
    %128 = vmatpush1.msra.mxu0 %v69
    %129 = vmatprep.subr.mxu0 %v73
    %130 = vmatpush1.msra.mxu0 %v72
    %131 = vmatprep.subr.mxu0 %v76
    %132 = vmatpush1.msra.mxu0 %v75
    %133 = vmatprep.subr.mxu0 %v79
    %134 = vmatpush1.msra.mxu0 %v78
    %135 = vmatprep.subr.mxu0 %v82
    %136 = vmatpush1.msra.mxu0 %v81
    %137 = vmatprep.subr.mxu0 %v85
    %138 = vmatpush1.msra.mxu0 %v84
    %139 = vmatprep.subr.mxu0 %v88
    %140 = vmatpush1.msra.mxu0 %v87
    %141 = vmatprep.subr.mxu0 %v91
    %142 = vmatpush1.msra.mxu0 %v90
    %143 = vmatprep.subr.mxu0 %v94
    %144 = vmatpush1.msra.mxu0 %v93
    %145 = vmatprep.subr.mxu0 0.0
    %146 = vmatpush1.msra.mxu0 0.0
    %147 = vmatprep.subr.mxu0 0.0
    %148 = vmatpush1.msra.mxu0 0.0
    %149 = vmatprep.subr.mxu0 0.0
    %150 = vmatpush1.msra.mxu0 0.0
    %151 = vmatprep.subr.mxu0 0.0
    %152 = vmatpush1.msra.mxu0 0.0
    %153 = vmatprep.subr.mxu0 0.0
    %154 = vmatpush1.msra.mxu0 0.0
    %155 = vmatprep.subr.mxu0 0.0
    %156 = vmatpush1.msra.mxu0 0.0
    %157 = vmatprep.subr.mxu0 0.0
    %158 = vmatpush1.msra.mxu0 0.0
    %159 = vmatprep.subr.mxu0 0.0
    %160 = vmatpush1.msra.mxu0 0.0
    %161 = vmatprep.subr.mxu0 0.0
    %162 = vmatpush1.msra.mxu0 0.0
    %163 = vmatprep.subr.mxu0 0.0
    %164 = vmatpush1.msra.mxu0 0.0
    %165 = vmatprep.subr.mxu0 0.0
    %166 = vmatpush1.msra.mxu0 0.0
    %167 = vmatprep.subr.mxu0 0.0
    %168 = vmatpush1.msra.mxu0 0.0
    %169 = vmatprep.subr.mxu0 0.0
    %170 = vmatpush1.msra.mxu0 0.0
    %171 = vmatprep.subr.mxu0 0.0
    %172 = vmatpush1.msra.mxu0 0.0
    %173 = vmatprep.subr.mxu0 0.0
    %174 = vmatpush1.msra.mxu0 0.0
    %175 = vmatprep.subr.mxu0 0.0
    %176 = vmatpush1.msra.mxu0 0.0
    %177 = vmatprep.mubr.f32.mxu0 0.0
    %178 = vmatmul.mubr.f32.gmra.mrb[0].mxu0 %v46
    %v179 = vpop.f32.mrb[0].mxu0
    %v180 = vadd.f32 %v101, %v179
    %v181 = vpop.f32.mrb[0].mxu0
    %v182 = vadd.f32 %v105, %v181
    %183 = vmatprep.mubr.f32.mxu0 0.0
    %184 = vmatmul.mubr.f32.gmra.mrb[0].mxu0 %v47
    %v185 = vpop.f32.mrb[0].mxu0
    %v186 = vadd.f32 %v101, %v185
    %v187 = vpop.f32.mrb[0].mxu0
    %v188 = vadd.f32 %v105, %v187
    %189 = vdwg.mxu0
    %190 = vmatprep.subr.mxu0 0.0
    %191 = vmatpush1.msra.mxu0 %v50
    %192 = vmatprep.subr.mxu0 0.0
    %193 = vmatpush1.msra.mxu0 %v53
    %194 = vmatprep.subr.mxu0 0.0
    %195 = vmatpush1.msra.mxu0 %v56
    %196 = vmatprep.subr.mxu0 0.0
    %197 = vmatpush1.msra.mxu0 %v59
    %198 = vmatprep.subr.mxu0 0.0
    %199 = vmatpush1.msra.mxu0 %v62
    %200 = vmatprep.subr.mxu0 0.0
    %201 = vmatpush1.msra.mxu0 %v65
    %202 = vmatprep.subr.mxu0 0.0
    %203 = vmatpush1.msra.mxu0 %v68
    %204 = vmatprep.subr.mxu0 0.0
    %205 = vmatpush1.msra.mxu0 %v71
    %206 = vmatprep.subr.mxu0 0.0
    %207 = vmatpush1.msra.mxu0 %v74
    %208 = vmatprep.subr.mxu0 0.0
    %209 = vmatpush1.msra.mxu0 %v77
    %210 = vmatprep.subr.mxu0 0.0
    %211 = vmatpush1.msra.mxu0 %v80
    %212 = vmatprep.subr.mxu0 0.0
    %213 = vmatpush1.msra.mxu0 %v83
    %214 = vmatprep.subr.mxu0 0.0
    %215 = vmatpush1.msra.mxu0 %v86
    %216 = vmatprep.subr.mxu0 0.0
    %217 = vmatpush1.msra.mxu0 %v89
    %218 = vmatprep.subr.mxu0 0.0
    %219 = vmatpush1.msra.mxu0 %v92
    %220 = vmatprep.subr.mxu0 0.0
    %221 = vmatpush1.msra.mxu0 %v95
    %222 = vmatprep.subr.mxu0 0.0
    %223 = vmatpush1.msra.mxu0 0.0
    %224 = vmatprep.subr.mxu0 0.0
    %225 = vmatpush1.msra.mxu0 0.0
    %226 = vmatprep.subr.mxu0 0.0
    %227 = vmatpush1.msra.mxu0 0.0
    %228 = vmatprep.subr.mxu0 0.0
    %229 = vmatpush1.msra.mxu0 0.0
    %230 = vmatprep.subr.mxu0 0.0
    %231 = vmatpush1.msra.mxu0 0.0
    %232 = vmatprep.subr.mxu0 0.0
    %233 = vmatpush1.msra.mxu0 0.0
    %234 = vmatprep.subr.mxu0 0.0
    %235 = vmatpush1.msra.mxu0 0.0
    %236 = vmatprep.subr.mxu0 0.0
    %237 = vmatpush1.msra.mxu0 0.0
    %238 = vmatprep.subr.mxu0 0.0
    %239 = vmatpush1.msra.mxu0 0.0
    %240 = vmatprep.subr.mxu0 0.0
    %241 = vmatpush1.msra.mxu0 0.0
    %242 = vmatprep.subr.mxu0 0.0
    %243 = vmatpush1.msra.mxu0 0.0
    %244 = vmatprep.subr.mxu0 0.0
    %245 = vmatpush1.msra.mxu0 0.0
    %246 = vmatprep.subr.mxu0 0.0
    %247 = vmatpush1.msra.mxu0 0.0
    %248 = vmatprep.subr.mxu0 0.0
    %249 = vmatpush1.msra.mxu0 0.0
    %250 = vmatprep.subr.mxu0 0.0
    %251 = vmatpush1.msra.mxu0 0.0
    %252 = vmatprep.subr.mxu0 0.0
    %253 = vmatpush1.msra.mxu0 0.0
    %254 = vmatprep.mubr.f32.mxu0 0.0
    %255 = vmatmul.mubr.f32.gmra.mrb[0].mxu0 %v46
    %v256 = vpop.f32.mrb[0].mxu0
    %v257 = vadd.f32 %v109, %v256
    %v258 = vpop.f32.mrb[0].mxu0
    %259 = vmatprep.mubr.f32.mxu0 0.0
    %260 = vmatmul.mubr.f32.gmra.mrb[0].mxu0 %v47
    %v261 = vpop.f32.mrb[0].mxu0
    %v262 = vadd.f32 %v109, %v261
    %v263 = vpop.f32.mrb[0].mxu0
    %264 = vdwg.mxu0
    %v265 = vld [vmem:[%s3] sm:$0x1]
    %v267 = vlaneseq
    %v268 = vshrl.u32 %v267, 7
    %v269 = vsub.s32 0, %v268
    %v270 = vrot.slane %v265, %v269
    %v272 = vadd.f32 %v270, 0.0
    %v273 = vadd.f32 %v272, %v182
    %v274 = vadd.f32 %v272, %v188
    %v275 = vadd.f32 %v272, %v180
    %v276 = vadd.f32 %v272, %v186
    %v279 = vrot.slane %v257, 7
    %v280 = vrot.slane %v262, 7
    %v283 = vadd.f32 %v275, %v279
    %v284 = vadd.f32 %v276, %v280
    %v285 = vadd.f32 %v272, %v257
    %v286 = vadd.f32 %v272, %v262
    %v289 = vrot.slane %v283, 1
    %v290 = vrot.slane %v284, 1
    %vm293 = vcmask 1046528
    %v294 = vsel %vm293, %v289, %v285
    %v295 = vsel %vm293, %v290, %v286
    %296 = vst [vmem:[#allocation7] sm:$0xff] %v273
    %297 = vst [vmem:[#allocation7 + $0x8] sm:$0xff] %v294
    %298 = vst [vmem:[#allocation7 + $0x10] sm:$0xff] %v274
    %299 = vst [vmem:[#allocation7 + $0x18] sm:$0xff] %v295
    // Predicated region
    $region26: #{tpu_custom_call.1} parent=1 // pred_check
      _
    $region27: #{tpu_custom_call.1} parent=1 // pred_check_branch
      %301 = sbr.rel (0) target = $region29
    $region28: #{tpu_custom_call.1} parent=1 // pred_region
      %s303 = ssub.s32 512, 512
      %304 = vsyncadd [#allocation4], %s303
      %s305 = sshll.u32 [#allocation7], 4
      %s306 = int_to_ptr.vmem [resolvable:$true] %s305
      %311 = dma.vmem_to_hbm [thread:$0]  %s306, 512, %s4, [#allocation4], 256, 256, 16
    $region29: #{tpu_custom_call.1} parent=1 // pred_fallthru
      _
    // Predicated region
    $region30: #{tpu_custom_call.1} parent=1 // pred_check
      _
    $region31: #{tpu_custom_call.1} parent=1 // pred_check_branch
      %313 = sbr.rel (0) target = $region33
    $region32: #{tpu_custom_call.1} parent=1 // pred_region
      %314 = dma.done [#allocation4], 512
    $region33: #{tpu_custom_call.1} parent=1 // pred_fallthru
      _
    %315 = vsyncpa [#allocation3], 1
    %316 = vsyncpa [#allocation6], 1
    %317 = vsyncpa [#allocation4], 1

</llo_original>
